<compile_context>
chip_gen: v5e
topology: v5e:2x2
jax: 0.10.0
libtpu: 0.0.40
codegen_flags: <defaults>
</compile_context>

<pallas_src>
import jax
import jax.numpy as jnp
from jax.experimental import pallas as pl
from jax.experimental.pallas import tpu as pltpu


def _round_up(x, m):
    return (x + m - 1) // m * m


# ---------------------------------------------------------------------------
# Kernels
# ---------------------------------------------------------------------------
def _linear_whole_kernel(x_ref, w_ref, o_ref):
    # Single MXU matmul over whole (small) operands resident in VMEM.
    o_ref[...] = jnp.dot(
        x_ref[...], w_ref[...], preferred_element_type=jnp.float32
    ).astype(o_ref.dtype)


def _linear_tiled_kernel(x_ref, w_ref, o_ref, acc_ref):
    @pl.when(pl.program_id(2) == 0)
    def _():
        acc_ref[...] = jnp.zeros_like(acc_ref)

    acc_ref[...] += jnp.dot(
        x_ref[...], w_ref[...], preferred_element_type=jnp.float32
    )

    @pl.when(pl.program_id(2) == pl.num_programs(2) - 1)
    def _():
        o_ref[...] = acc_ref[...].astype(o_ref.dtype)


# ---------------------------------------------------------------------------
# Param prep (done once, not per forward)
# ---------------------------------------------------------------------------
def prepare_weight(weight_out_in, compute_dtype=jnp.bfloat16):
    """nn.Linear weight (D_out, D_in) -> kernel layout (D_in, D_out), bf16."""
    return jnp.asarray(weight_out_in).T.astype(compute_dtype)


# ---------------------------------------------------------------------------
# Forward
# ---------------------------------------------------------------------------
def classifier_forward(x, w_in_out, *, force_tiled=False,
                       small_path_vmem_budget=8 * 1024 * 1024):
    """x: (B, ...) any shape flattened like torch .view(B, -1).
    w_in_out: pre-transposed weight (D_in, D_out) from prepare_weight()."""
    B = x.shape[0]
    x_flat = x.reshape(B, -1)                 # == torch .view(B, -1) (row-major)
    d_in, d_out = w_in_out.shape
    assert x_flat.shape[1] == d_in, "weight / input feature mismatch"

    compute_dtype = w_in_out.dtype
    x_c = x_flat.astype(compute_dtype)
    itemsize = jnp.dtype(compute_dtype).itemsize

    # ---------------- small-shape path: no grid, whole arrays in VMEM ------
    Mp8 = _round_up(B, 8)                     # fill sublanes -> unmasked stores
    whole_bytes = (Mp8 * d_in + d_in * d_out) * itemsize + Mp8 * d_out * 4
    if (not force_tiled) and whole_bytes <= small_path_vmem_budget:
        if Mp8 != B:
            x_c = jnp.pad(x_c, ((0, Mp8 - B), (0, 0)))
        out = pl.pallas_call(
            _linear_whole_kernel,
            out_shape=jax.ShapeDtypeStruct((Mp8, d_out), jnp.float32),
            in_specs=[
                pl.BlockSpec(memory_space=pltpu.MemorySpace.VMEM),
                pl.BlockSpec(memory_space=pltpu.MemorySpace.VMEM),
            ],
            out_specs=pl.BlockSpec(memory_space=pltpu.MemorySpace.VMEM),
            cost_estimate=pl.CostEstimate(
                flops=2 * Mp8 * d_in * d_out,
                transcendentals=0,
                bytes_accessed=whole_bytes,
            ),
        )(x_c, w_in_out)
        return out[:B]

    # ---------------- production-size path: tiled M/N/K with f32 acc -------
    tm, tn, tk = 128, 256, 256                # 256-wide N/K for v6e/v7x MXU
    Mp = _round_up(B, tm)
    Kp = _round_up(d_in, tk)
    Np = _round_up(d_out, tn)
    # NOTE: for a real production weight, pre-pad to (Kp, Np) once at init so
    # this jnp.pad does not re-stream the weight every call.
    x_p = jnp.pad(x_c, ((0, Mp - B), (0, Kp - d_in)))
    w_p = jnp.pad(w_in_out, ((0, Kp - d_in), (0, Np - d_out)))
    grid = (Mp // tm, Np // tn, Kp // tk)

    out = pl.pallas_call(
        _linear_tiled_kernel,
        out_shape=jax.ShapeDtypeStruct((Mp, Np), jnp.float32),
        grid_spec=pltpu.PrefetchScalarGridSpec(
            num_scalar_prefetch=0,
            grid=grid,
            in_specs=[
                pl.BlockSpec((tm, tk), lambda i, j, k: (i, k)),
                pl.BlockSpec((tk, tn), lambda i, j, k: (k, j)),
            ],
            out_specs=pl.BlockSpec((tm, tn), lambda i, j, k: (i, j)),
            scratch_shapes=[pltpu.VMEM((tm, tn), jnp.float32)],
        ),
        compiler_params=pltpu.CompilerParams(
            dimension_semantics=("parallel", "parallel", "arbitrary"),
            vmem_limit_bytes=32 * 1024 * 1024,
        ),
        cost_estimate=pl.CostEstimate(
            flops=2 * Mp * Kp * Np,
            transcendentals=0,
            bytes_accessed=(Mp * Kp + Kp * Np) * itemsize + Mp * Np * 4,
        ),
    )(x_p, w_p)
    return out[:B, :d_out]


if __name__ == "__main__":
    key = jax.random.PRNGKey(0)
    k_x, k_w, k_x2, k_w2 = jax.random.split(key, 4)

    # ---- small-shape path (the module's intended use) ---------------------
    B, C, H, W = 2, 4, 8, 8
    input_channel = C * H * W          # 256
    output_channel = 128

    x = jax.random.normal(k_x, (B, C, H, W), jnp.float32)
    bound = 1.0 / (input_channel ** 0.5)
    w_torch = jax.random.uniform(
        k_w, (output_channel, input_channel), jnp.float32,
        minval=-bound, maxval=bound)           # nn.Linear weight layout (D_out, D_in)
    w_param = prepare_weight(w_torch)          # one-time transpose + bf16 cast

    out = jax.block_until_ready(classifier_forward(x, w_param))
    ref = x.reshape(B, -1) @ w_torch.T
    assert out.shape == (B, output_channel)
    # bf16 inputs -> loosened tolerance vs. the f32 reference.
    assert jnp.allclose(out, ref, atol=5e-2, rtol=5e-2), \
        float(jnp.max(jnp.abs(out - ref)))

    # ---- tiled (production-size) path sanity check -------------------------
    d_in2, d_out2 = 640, 384                   # non-multiples -> exercises padding
    x2 = jax.random.normal(k_x2, (B, d_in2), jnp.float32)
    bound2 = 1.0 / (d_in2 ** 0.5)
    w2_torch = jax.random.uniform(
        k_w2, (d_out2, d_in2), jnp.float32, minval=-bound2, maxval=bound2)
    w2_param = prepare_weight(w2_torch)
    out2 = jax.block_until_ready(
        classifier_forward(x2, w2_param, force_tiled=True))
    ref2 = x2 @ w2_torch.T
    assert out2.shape == (B, d_out2)
    assert jnp.allclose(out2, ref2, atol=5e-2, rtol=5e-2), \
        float(jnp.max(jnp.abs(out2 - ref2)))

    print("KERNEL_OK")
</pallas_src>

<mosaic_0001>
module attributes {stable_mosaic.version = 11 : i64} {
  func.func @_linear_whole_kernel(%arg0: memref<8x256xbf16, #tpu.memory_space<vmem>>, %arg1: memref<256x128xbf16, #tpu.memory_space<vmem>>, %arg2: memref<8x128xf32, #tpu.memory_space<vmem>>) attributes {dimension_semantics = [], scalar_prefetch = 0 : i64, scratch_operands = 0 : i64, tpu.core_type = #tpu.core_type<tc>} {
    %c0 = arith.constant 0 : index
    %c0_0 = arith.constant 0 : index
    %0 = vector.load %arg0[%c0, %c0_0] : memref<8x256xbf16, #tpu.memory_space<vmem>>, vector<8x256xbf16>
    %c0_1 = arith.constant 0 : index
    %c0_2 = arith.constant 0 : index
    %1 = vector.load %arg1[%c0_1, %c0_2] : memref<256x128xbf16, #tpu.memory_space<vmem>>, vector<256x128xbf16>
    %cst = arith.constant dense<0.000000e+00> : vector<8x128xf32>
    %2 = tpu.matmul %0, %1, %cst {dimension_numbers = #tpu.dot_dimension_numbers<[1], [0], [0], [1], [0, 0, 1, 1], [], []>} : vector<8x256xbf16>, vector<256x128xbf16>, vector<8x128xf32> -> vector<8x128xf32>
    %c0_3 = arith.constant 0 : index
    %c0_4 = arith.constant 0 : index
    %3 = vector.load %arg2[%c0_3, %c0_4] : memref<8x128xf32, #tpu.memory_space<vmem>>, vector<8x128xf32>
    tpu.vector_store %arg2[%c0_3, %c0_4], %2 {strides = array<i32>} : memref<8x128xf32, #tpu.memory_space<vmem>>, vector<8x128xf32>,
    return
  }
}

</mosaic_0001>

<llo_original>
// kernel: tpu_custom_call.1
$region0: #{tpu_custom_call.1}
  #allocation0 [shape = 'u32[]', space=smem, size = 0x4, offset = 0x4, fixed_abs, tag = 'smem constant byte address 0x4 - core index']
  #allocation1 [shape = 'u32[72,128]{1,0:T(1,128)}', space=vmem, size = 0x9000, scoped, tag = 'internal scratch']
  %s0 = inlined_call_operand.hbm [shape: bf16[8,256], index: 0, kind: input, shape index: {}]
  %s1 = inlined_call_operand.hbm [shape: bf16[256,128], index: 1, kind: input, shape index: {}]
  %s2 = inlined_call_operand.hbm [shape: f32[8,128], index: 2, kind: output, shape index: {}]
  %s3 = sld [smem:[#allocation0]]
  $region26: #{tpu_custom_call.1} parent=0
    _
  %s5 = ssub.s32 1, %s3
  %s6 = scalar_select 0, %s5, %s3
  $region1: #{tpu_custom_call.1} parent=0
    #allocation2 [shape = 'u8[4096]{0}', space=vmem, size = 0x1000, scoped, tag = 'input window, operand 0, single buffered']
    #allocation3 [shape = 's32[1]{0}', space=sflag, size = 0x4, scoped, tag = 'scoped memory for tpu_custom_call.1']
    #allocation4 [shape = 's32[1]{0}', space=sflag, size = 0x4, scoped, tag = 'scoped memory for tpu_custom_call.1']
    #allocation5 [shape = 'u8[65536]{0}', space=vmem, size = 0x10000, scoped, tag = 'input window, operand 1, single buffered']
    #allocation6 [shape = 's32[1]{0}', space=sflag, size = 0x4, scoped, tag = 'scoped memory for tpu_custom_call.1']
    #allocation7 [shape = 'u8[4096]{0}', space=vmem, size = 0x1000, scoped, tag = 'output window, operand 0, single buffered']
    %7 = vsyncpa [#allocation3], 0
    %8 = vsyncpa [#allocation6], 0
    %9 = vsyncpa [#allocation4], 0
    // Predicated region
    $region2: #{tpu_custom_call.1} parent=1 // pred_check
      _
    $region3: #{tpu_custom_call.1} parent=1 // pred_check_branch
      %11 = sbr.rel (0) target = $region5
    $region4: #{tpu_custom_call.1} parent=1 // pred_region
      %13 = vsyncadd [#allocation3], 0
      %s15 = sshll.u32 %s0, 4
      %s16 = int_to_ptr.hbm [resolvable:$true] %s15
      %s17 = sshll.u32 [#allocation2], 4
      %s18 = int_to_ptr.vmem [resolvable:$true] %s17
      %20 = dma.hbm_to_vmem [thread:$0]  %s16, 128, %s18, [#allocation3]
    $region5: #{tpu_custom_call.1} parent=1 // pred_fallthru
      _
    // Predicated region
    $region6: #{tpu_custom_call.1} parent=1 // pred_check
      _
    $region7: #{tpu_custom_call.1} parent=1 // pred_check_branch
      %22 = sbr.rel (0) target = $region9
    $region8: #{tpu_custom_call.1} parent=1 // pred_region
      %24 = vsyncadd [#allocation6], 0
      %s25 = sshll.u32 %s1, 4
      %s26 = int_to_ptr.hbm [resolvable:$true] %s25
      %s27 = sshll.u32 [#allocation5], 4
      %s28 = int_to_ptr.vmem [resolvable:$true] %s27
      %33 = dma.hbm_to_vmem [thread:$0]  %s26, 2048, %s28, [#allocation6], 64, 64, 4
    $region9: #{tpu_custom_call.1} parent=1 // pred_fallthru
      _
    // Predicated region
    $region10: #{tpu_custom_call.1} parent=1 // pred_check
      _
    $region11: #{tpu_custom_call.1} parent=1 // pred_check_branch
      %35 = sbr.rel (0) target = $region13
    $region12: #{tpu_custom_call.1} parent=1 // pred_region
      %37 = dma.done [#allocation3], 128
    $region13: #{tpu_custom_call.1} parent=1 // pred_fallthru
      _
    // Predicated region
    $region14: #{tpu_custom_call.1} parent=1 // pred_check
      _
    $region15: #{tpu_custom_call.1} parent=1 // pred_check_branch
      %39 = sbr.rel (0) target = $region17
    $region16: #{tpu_custom_call.1} parent=1 // pred_region
      %41 = dma.done [#allocation6], 2048
    $region17: #{tpu_custom_call.1} parent=1 // pred_fallthru
      _
    %v42 = vld [vmem:[#allocation2] sm:$0xff]
    %v43 = vld [vmem:[#allocation5] sm:$0xf]
    %v44 = vld [vmem:[#allocation5 + $0x4] sm:$0xf]
    %v45 = vld [vmem:[#allocation5 + $0x8] sm:$0xf]
    %v46 = vld [vmem:[#allocation5 + $0xc] sm:$0xf]
    %v47 = vld [vmem:[#allocation5 + $0x10] sm:$0xf]
    %v48 = vld [vmem:[#allocation5 + $0x14] sm:$0xf]
    %v49 = vld [vmem:[#allocation5 + $0x18] sm:$0xf]
    %v50 = vld [vmem:[#allocation5 + $0x1c] sm:$0xf]
    %v51 = vld [vmem:[#allocation5 + $0x20] sm:$0xf]
    %v52 = vld [vmem:[#allocation5 + $0x24] sm:$0xf]
    %v53 = vld [vmem:[#allocation5 + $0x28] sm:$0xf]
    %v54 = vld [vmem:[#allocation5 + $0x2c] sm:$0xf]
    %v55 = vld [vmem:[#allocation5 + $0x30] sm:$0xf]
    %v56 = vld [vmem:[#allocation5 + $0x34] sm:$0xf]
    %v57 = vld [vmem:[#allocation5 + $0x38] sm:$0xf]
    %v58 = vld [vmem:[#allocation5 + $0x3c] sm:$0xf]
    %v59 = vld [vmem:[#allocation5 + $0x40] sm:$0xf]
    %v60 = vld [vmem:[#allocation5 + $0x44] sm:$0xf]
    %v61 = vld [vmem:[#allocation5 + $0x48] sm:$0xf]
    %v62 = vld [vmem:[#allocation5 + $0x4c] sm:$0xf]
    %v63 = vld [vmem:[#allocation5 + $0x50] sm:$0xf]
    %v64 = vld [vmem:[#allocation5 + $0x54] sm:$0xf]
    %v65 = vld [vmem:[#allocation5 + $0x58] sm:$0xf]
    %v66 = vld [vmem:[#allocation5 + $0x5c] sm:$0xf]
    %v67 = vld [vmem:[#allocation5 + $0x60] sm:$0xf]
    %v68 = vld [vmem:[#allocation5 + $0x64] sm:$0xf]
    %v69 = vld [vmem:[#allocation5 + $0x68] sm:$0xf]
    %v70 = vld [vmem:[#allocation5 + $0x6c] sm:$0xf]
    %v71 = vld [vmem:[#allocation5 + $0x70] sm:$0xf]
    %v72 = vld [vmem:[#allocation5 + $0x74] sm:$0xf]
    %v73 = vld [vmem:[#allocation5 + $0x78] sm:$0xf]
    %v74 = vld [vmem:[#allocation5 + $0x7c] sm:$0xf]
    %v76 = vunpack.c.l.b16 %v42
    %v77 = vunpack.c.h.b16 %v42
    %v78 = vpack.c.b16 %v76, %v76
    %v79 = vpack.c.b16 %v77, %v77
    %v114 = vunpack.c.l.b16 %v43
    %v115 = vunpack.c.l.b16 %v44
    %v116 = vunpack.c.l.b16 %v45
    %v117 = vunpack.c.l.b16 %v46
    %v118 = vunpack.c.l.b16 %v47
    %v119 = vunpack.c.l.b16 %v48
    %v120 = vunpack.c.l.b16 %v49
    %v121 = vunpack.c.l.b16 %v50
    %v122 = vunpack.c.l.b16 %v51
    %v123 = vunpack.c.l.b16 %v52
    %v124 = vunpack.c.l.b16 %v53
    %v125 = vunpack.c.l.b16 %v54
    %v126 = vunpack.c.l.b16 %v55
    %v127 = vunpack.c.l.b16 %v56
    %v128 = vunpack.c.l.b16 %v57
    %v129 = vunpack.c.l.b16 %v58
    %v130 = vunpack.c.l.b16 %v59
    %v131 = vunpack.c.l.b16 %v60
    %v132 = vunpack.c.l.b16 %v61
    %v133 = vunpack.c.l.b16 %v62
    %v134 = vunpack.c.l.b16 %v63
    %v135 = vunpack.c.l.b16 %v64
    %v136 = vunpack.c.l.b16 %v65
    %v137 = vunpack.c.l.b16 %v66
    %v138 = vunpack.c.l.b16 %v67
    %v139 = vunpack.c.l.b16 %v68
    %v140 = vunpack.c.l.b16 %v69
    %v141 = vunpack.c.l.b16 %v70
    %v142 = vunpack.c.l.b16 %v71
    %v143 = vunpack.c.l.b16 %v72
    %v144 = vunpack.c.l.b16 %v73
    %v145 = vunpack.c.l.b16 %v74
    %v146 = vpack.c.b16 %v115, %v114
    %v147 = vpack.c.b16 %v117, %v116
    %v148 = vpack.c.b16 %v119, %v118
    %v149 = vpack.c.b16 %v121, %v120
    %v150 = vpack.c.b16 %v123, %v122
    %v151 = vpack.c.b16 %v125, %v124
    %v152 = vpack.c.b16 %v127, %v126
    %v153 = vpack.c.b16 %v129, %v128
    %v154 = vpack.c.b16 %v131, %v130
    %v155 = vpack.c.b16 %v133, %v132
    %v156 = vpack.c.b16 %v135, %v134
    %v157 = vpack.c.b16 %v137, %v136
    %v158 = vpack.c.b16 %v139, %v138
    %v159 = vpack.c.b16 %v141, %v140
    %v160 = vpack.c.b16 %v143, %v142
    %v161 = vpack.c.b16 %v145, %v144
    %178 = vmatpush.bf16.msra.mxu0 %v153
    %179 = vmatpush.bf16.msra.mxu0 %v152
    %180 = vmatpush.bf16.msra.mxu0 %v151
    %181 = vmatpush.bf16.msra.mxu0 %v150
    %182 = vmatpush.bf16.msra.mxu0 %v149
    %183 = vmatpush.bf16.msra.mxu0 %v148
    %184 = vmatpush.bf16.msra.mxu0 %v147
    %185 = vmatpush.bf16.msra.mxu0 %v146
    %186 = vmatmul.bf16.gmra.mxu0 %v78
    %v187 = vpop.f32.mrf.mxu0
    %v188 = vadd.f32 0.0, %v187
    %v189 = vpop.f32.mrf.mxu0
    %190 = vdwg.mxu0
    %191 = vmatpush.bf16.msra.mxu0 %v161
    %192 = vmatpush.bf16.msra.mxu0 %v160
    %193 = vmatpush.bf16.msra.mxu0 %v159
    %194 = vmatpush.bf16.msra.mxu0 %v158
    %195 = vmatpush.bf16.msra.mxu0 %v157
    %196 = vmatpush.bf16.msra.mxu0 %v156
    %197 = vmatpush.bf16.msra.mxu0 %v155
    %198 = vmatpush.bf16.msra.mxu0 %v154
    %199 = vmatmul.bf16.gmra.mxu0 %v79
    %v200 = vpop.f32.mrf.mxu0
    %v201 = vadd.f32 %v188, %v200
    %v202 = vpop.f32.mrf.mxu0
    %203 = vdwg.mxu0
    %204 = vst [vmem:[#allocation7] sm:$0xff] %v201
    // Predicated region
    $region18: #{tpu_custom_call.1} parent=1 // pred_check
      _
    $region19: #{tpu_custom_call.1} parent=1 // pred_check_branch
      %206 = sbr.rel (0) target = $region21
    $region20: #{tpu_custom_call.1} parent=1 // pred_region
      %208 = vsyncadd [#allocation4], 0
      %s210 = sshll.u32 [#allocation7], 4
      %s211 = int_to_ptr.vmem [resolvable:$true] %s210
      %s212 = sshll.u32 %s2, 4
      %s213 = int_to_ptr.hbm [resolvable:$true] %s212
      %215 = dma.vmem_to_hbm [thread:$0]  %s211, 128, %s213, [#allocation4]
    $region21: #{tpu_custom_call.1} parent=1 // pred_fallthru
      _
    // Predicated region
    $region22: #{tpu_custom_call.1} parent=1 // pred_check
      _
    $region23: #{tpu_custom_call.1} parent=1 // pred_check_branch
      %217 = sbr.rel (0) target = $region25
    $region24: #{tpu_custom_call.1} parent=1 // pred_region
      %219 = dma.done [#allocation4], 128
    $region25: #{tpu_custom_call.1} parent=1 // pred_fallthru
      _
    %220 = vsyncpa [#allocation3], 1
    %221 = vsyncpa [#allocation6], 1
    %222 = vsyncpa [#allocation4], 1

</llo_original>
